<compile_context>
chip_gen: v6e
topology: v6e:2x2x1
jax: 0.10.0
libtpu: 0.0.40
codegen_flags: <defaults>
</compile_context>

<pallas_src>
import jax
import jax.numpy as jnp
from jax import lax
from jax.experimental import pallas as pl
from jax.experimental.pallas import tpu as pltpu


# -----------------------------------------------------------------------------
# BaseLoss: abstract contract mirrored from the torch module.
# -----------------------------------------------------------------------------
DEFAULT_LOSS_DEVICE = "cpu"  # torch.device('cpu') analogue; placement is a no-op in JAX.


class BaseLoss:
    """JAX counterpart of the abstract torch BaseLoss."""

    def __init__(self) -> None:
        pass

    def forward(self, *args, **kwargs):
        raise NotImplementedError

    def __call__(self, *args, **kwargs):
        return self.forward(*args, **kwargs)


# -----------------------------------------------------------------------------
# Tiling / VMEM helpers
# -----------------------------------------------------------------------------
# Combined (all streamed inputs) bytes per grid step.  8 MiB combined means
# ~4 MiB per input; with 2 inputs x 2 pipeline buffers that is ~16 MiB of DMA
# buffers, which we make explicit via vmem_limit_bytes below (v5e's scoped
# default is only 16 MiB; v7x physical VMEM is 64 MiB).
_MAX_BLOCK_BYTES = 8 << 20
_PALLAS_L1_MIN_BYTES = 1 << 20   # below this, plain jnp beats a pallas_call launch


def _sublane_align(dtype) -> int:
    # f32 -> 8, bf16 -> 16, int8/fp8 -> 32 rows per packed sublane tile.
    return max(8, 32 // jnp.dtype(dtype).itemsize)


def _pick_row_tile(rows: int, row_bytes: int, align: int) -> int:
    """Largest leading-dim tile (multiple of `align`) within the block budget."""
    if rows <= align or rows * row_bytes <= _MAX_BLOCK_BYTES:
        return rows  # full extent — always a legal block dim
    budget = max(align, (_MAX_BLOCK_BYTES // max(row_bytes, 1)) // align * align)
    return int(min(rows, budget))


def _vmem_limit_bytes(*component_bytes) -> int:
    """Scoped-VMEM request: computed need + headroom, clamped to a range legal on
    every generation (v7x physical VMEM is only 64 MiB)."""
    needed = int(sum(int(b) for b in component_bytes)) + (8 << 20)
    return int(min(max(needed, 32 << 20), 56 << 20))


# -----------------------------------------------------------------------------
# Kernel 1 (fused, per LSTM layer):
#   loss = mean(| G_s - G_t |),  G = (mean_0 x) @ (mean_0 x).T
# Streams the student (D0,R,Hs) and teacher (D0,R,Ht) tensors over dim 0 in the
# same grid, accumulates per-tensor row sums into two VMEM f32 buffers (pure
# VALU per step), and at the last step runs the two small MXU grams plus the
# single cross-lane |G_s - G_t| reduction, writing one SMEM scalar.
# -----------------------------------------------------------------------------
def _fused_self_similarity_l1(student: jax.Array, teacher: jax.Array) -> jax.Array:
    assert student.ndim == 3 and teacher.ndim == 3, "LSTM features must be 3-D"
    d0, r, hs = student.shape
    d0_t, r_t, ht = teacher.shape
    assert d0 == d0_t and r == r_t, "student/teacher must share dims 0 and 1"

    s_sz = student.dtype.itemsize
    t_sz = teacher.dtype.itemsize
    row_bytes = r * hs * s_sz + r * ht * t_sz        # combined bytes per dim-0 slice
    tile_d0 = _pick_row_tile(d0, row_bytes, 1)
    grid_n = pl.cdiv(d0, tile_d0)
    needs_mask = (d0 % tile_d0) != 0
    use_acc = grid_n > 1
    assert use_acc or not needs_mask                 # grid_n == 1  =>  tile_d0 == d0
    inv_d0 = 1.0 / float(d0)
    inv_r2 = 1.0 / float(r * r)

    def _gram(m):
        # Tiny (R,H)x(H,R) matmul; HIGHEST precision keeps f32 parity with the
        # reference at negligible cost (single small matmul).
        return lax.dot_general(m, m, (((1,), (1,)), ((), ())),
                               preferred_element_type=jnp.float32,
                               precision=lax.Precision.HIGHEST)

    def _finalize_scalar(mean_s, mean_t, o_ref):
        o_ref[0, 0] = jnp.sum(jnp.abs(_gram(mean_s) - _gram(mean_t))) * jnp.float32(inv_r2)

    if use_acc:
        def kernel(s_ref, t_ref, o_ref, acc_s, acc_t):
            pid = pl.program_id(0)

            @pl.when(pid == 0)
            def _init():
                acc_s[...] = jnp.zeros_like(acc_s)
                acc_t[...] = jnp.zeros_like(acc_t)

            xs = s_ref[...].astype(jnp.float32)       # (tile_d0, r, hs)
            xt = t_ref[...].astype(jnp.float32)       # (tile_d0, r, ht)

            if needs_mask:
                # Mask only on the last (ragged) step; every other step is a
                # plain VALU accumulate with zero extra vreg work.
                @pl.when(pid != grid_n - 1)
                def _full_add():
                    acc_s[...] += jnp.sum(xs, axis=0)
                    acc_t[...] += jnp.sum(xt, axis=0)

                @pl.when(pid == grid_n - 1)
                def _masked_add():
                    valid = d0 - pid * tile_d0
                    ids_s = lax.broadcasted_iota(jnp.int32, (tile_d0, r, hs), 0)
                    ids_t = lax.broadcasted_iota(jnp.int32, (tile_d0, r, ht), 0)
                    acc_s[...] += jnp.sum(jnp.where(ids_s < valid, xs, 0.0), axis=0)
                    acc_t[...] += jnp.sum(jnp.where(ids_t < valid, xt, 0.0), axis=0)
            else:
                acc_s[...] += jnp.sum(xs, axis=0)
                acc_t[...] += jnp.sum(xt, axis=0)

            @pl.when(pid == grid_n - 1)
            def _finalize():
                _finalize_scalar(acc_s[...] * jnp.float32(inv_d0),
                                 acc_t[...] * jnp.float32(inv_d0), o_ref)

        scratch_shapes = [pltpu.VMEM((r, hs), jnp.float32),
                          pltpu.VMEM((r, ht), jnp.float32)]
        acc_bytes = 4 * r * (hs + ht)
    else:
        # Single-block fast path: no VMEM accumulator round trip, no pl.when.
        def kernel(s_ref, t_ref, o_ref):
            mean_s = jnp.sum(s_ref[...].astype(jnp.float32), axis=0) * jnp.float32(inv_d0)
            mean_t = jnp.sum(t_ref[...].astype(jnp.float32), axis=0) * jnp.float32(inv_d0)
            _finalize_scalar(mean_s, mean_t, o_ref)

        scratch_shapes = []
        acc_bytes = 0

    block_bytes = tile_d0 * r * (hs * s_sz + ht * t_sz)
    gram_bytes = 2 * 4 * r * r
    # TODO(synk): if a single (R,Hs)+(R,Ht) dim-0 slice alone blows v7x's 64 MiB
    # VMEM (tile_d0 clamps to 1 with a huge block), add a grid axis over H.
    vmem_limit = _vmem_limit_bytes(2 * block_bytes, acc_bytes, gram_bytes)

    cost = pl.CostEstimate(
        flops=int(d0 * r * (hs + ht) + 2 * r * r * (hs + ht) + 3 * r * r),
        transcendentals=0,
        bytes_accessed=int(d0 * r * (hs * s_sz + ht * t_sz) + 4),
    )

    # TODO(synk): on v7x a 2-way CORE_PARALLEL split of the dim-0 stream (with
    # per-core partial accumulators combined in a finalize step) could ~2x this;
    # no effect on v5e/v6e (single TensorCore), so it is not implemented here.
    out = pl.pallas_call(
        kernel,
        out_shape=jax.ShapeDtypeStruct((1, 1), jnp.float32),
        grid_spec=pltpu.PrefetchScalarGridSpec(
            num_scalar_prefetch=0,
            grid=(grid_n,),
            in_specs=[pl.BlockSpec((tile_d0, r, hs), lambda i: (i, 0, 0)),
                      pl.BlockSpec((tile_d0, r, ht), lambda i: (i, 0, 0))],
            out_specs=pl.BlockSpec((1, 1), lambda i: (0, 0),
                                   memory_space=pltpu.MemorySpace.SMEM),
            scratch_shapes=scratch_shapes,
        ),
        compiler_params=pltpu.CompilerParams(
            dimension_semantics=("arbitrary",),     # dim-0 reduction axis
            vmem_limit_bytes=vmem_limit,
        ),
        cost_estimate=cost,
    )(student, teacher)
    return out[0, 0]


# -----------------------------------------------------------------------------
# Kernel 2: lane-dense tiled L1 sum  ->  sum(|a - b|)  as a scalar f32.
# Operands are flattened and re-viewed as (rows, k*128) (free reshape of the
# contiguous buffer), rows are streamed in large blocks, partial sums live in
# an (8, C) VMEM vector accumulator, and the single cross-lane reduce happens
# once at the last grid step.  Only used for >= 1 MiB operands.
# -----------------------------------------------------------------------------
def _lane_dense_width(n: int) -> int:
    for cand in (2048, 1024, 512, 256, 128):
        if n % cand == 0:
            return cand
    return 0


def _pallas_l1_sum(a: jax.Array, b: jax.Array) -> jax.Array:
    a_flat = a.reshape(-1)
    b_flat = b.reshape(-1)
    n = a_flat.size
    c = _lane_dense_width(n)
    if c == 0:
        # Awkward element count with no multiple-of-128 divisor: a padded Pallas
        # view would force a wrapper copy, so let one fused XLA reduction do it.
        return jnp.sum(jnp.abs(a_flat.astype(jnp.float32) - b_flat.astype(jnp.float32)))

    a2 = a_flat.reshape(-1, c)     # free re-view of the contiguous buffer
    b2 = b_flat.reshape(-1, c)
    rows = a2.shape[0]
    align = _sublane_align(a.dtype)
    tile_r = _pick_row_tile(rows, c * (a.dtype.itemsize + b.dtype.itemsize), align)
    grid_n = pl.cdiv(rows, tile_r)
    needs_mask = (rows % tile_r) != 0
    use_acc = grid_n > 1
    assert use_acc or not needs_mask

    if use_acc:
        def kernel(a_ref, b_ref, o_ref, acc_ref):
            pid = pl.program_id(0)

            @pl.when(pid == 0)
            def _init():
                acc_ref[...] = jnp.zeros_like(acc_ref)

            d = jnp.abs(a_ref[...].astype(jnp.float32) - b_ref[...].astype(jnp.float32))

            # tile_r is a multiple of 8 here; folding rows into 8 sublanes keeps
            # the per-step reduction as pure VALU adds (no cross-lane traffic).
            if needs_mask:
                @pl.when(pid != grid_n - 1)
                def _full():
                    acc_ref[...] += jnp.sum(d.reshape(tile_r // 8, 8, c), axis=0)

                @pl.when(pid == grid_n - 1)
                def _masked():
                    valid = rows - pid * tile_r
                    row_ids = lax.broadcasted_iota(jnp.int32, (tile_r, c), 0)
                    dm = jnp.where(row_ids < valid, d, 0.0)
                    acc_ref[...] += jnp.sum(dm.reshape(tile_r // 8, 8, c), axis=0)
            else:
                acc_ref[...] += jnp.sum(d.reshape(tile_r // 8, 8, c), axis=0)

            @pl.when(pid == grid_n - 1)
            def _finalize():
                o_ref[0, 0] = jnp.sum(acc_ref[...])

        scratch_shapes = [pltpu.VMEM((8, c), jnp.float32)]
        acc_bytes = 8 * c * 4
    else:
        def kernel(a_ref, b_ref, o_ref):
            d = jnp.abs(a_ref[...].astype(jnp.float32) - b_ref[...].astype(jnp.float32))
            o_ref[0, 0] = jnp.sum(d)

        scratch_shapes = []
        acc_bytes = 0

    block_bytes = tile_r * c * (a.dtype.itemsize + b.dtype.itemsize)
    vmem_limit = _vmem_limit_bytes(2 * block_bytes, acc_bytes)
    cost = pl.CostEstimate(
        flops=int(3 * n),
        transcendentals=0,
        bytes_accessed=int(n * (a.dtype.itemsize + b.dtype.itemsize) + 4),
    )

    total = pl.pallas_call(
        kernel,
        out_shape=jax.ShapeDtypeStruct((1, 1), jnp.float32),
        grid_spec=pltpu.PrefetchScalarGridSpec(
            num_scalar_prefetch=0,
            grid=(grid_n,),
            in_specs=[pl.BlockSpec((tile_r, c), lambda i: (i, 0)),
                      pl.BlockSpec((tile_r, c), lambda i: (i, 0))],
            out_specs=pl.BlockSpec((1, 1), lambda i: (0, 0),
                                   memory_space=pltpu.MemorySpace.SMEM),
            scratch_shapes=scratch_shapes,
        ),
        compiler_params=pltpu.CompilerParams(
            dimension_semantics=("arbitrary",),     # row-stream reduction axis
            vmem_limit_bytes=vmem_limit,
        ),
        cost_estimate=cost,
    )(a2, b2)
    return total[0, 0]


def _l1_mean(a: jax.Array, b: jax.Array) -> jax.Array:
    """torch.nn.L1Loss (mean reduction).  Tiny operands stay in plain jnp."""
    assert a.shape == b.shape, "L1 operands must have identical shapes"
    n = a.size
    if n == 0:
        return jnp.float32(0.0)
    total_bytes = n * (a.dtype.itemsize + b.dtype.itemsize)
    if total_bytes < _PALLAS_L1_MIN_BYTES:
        # A single fused XLA abs-diff+reduce beats any pallas_call launch here.
        return jnp.mean(jnp.abs(a.astype(jnp.float32) - b.astype(jnp.float32)))
    return _pallas_l1_sum(a, b) / jnp.float32(n)


# -----------------------------------------------------------------------------
# KDSelfSimilarityLoss
# -----------------------------------------------------------------------------
class KDSelfSimilarityLoss(BaseLoss):
    """Loss between the layers of two models using self-similarity matrices."""

    def __init__(self, device=DEFAULT_LOSS_DEVICE):
        super().__init__()
        self.device = device  # kept for API parity; device placement is a no-op in JAX
        # (torch version prints 'Using KDSelfSimilarityLoss'; omitted to keep stdout clean)

    def forward(self, ce_loss, alpha, teacher_LSTM1, teacher_LSTM2, teacher_linear,
                student_LSTM1, student_LSTM2, student_linear):
        # One fused kernel per LSTM layer: stream student+teacher, build both
        # grams, and reduce mean(|G_s - G_t|) without an HBM round trip.
        lstm1_loss = _fused_self_similarity_l1(student_LSTM1, teacher_LSTM1)
        lstm2_loss = _fused_self_similarity_l1(student_LSTM2, teacher_LSTM2)
        linear_loss = _l1_mean(student_linear, teacher_linear)

        alpha_f = jnp.float32(alpha)
        ce = jnp.asarray(ce_loss, jnp.float32)
        return alpha_f * ce + (jnp.float32(1.0) - alpha_f) * (
            linear_loss + lstm1_loss + lstm2_loss)


# -----------------------------------------------------------------------------
# Demo / self-test
# -----------------------------------------------------------------------------
if __name__ == "__main__":
    key = jax.random.PRNGKey(0)
    ks = jax.random.split(key, 10)

    # Small shapes consistent with the module: LSTM features (batch, seq, hidden)
    # averaged over dim 0; student and teacher hidden sizes may differ.
    B, S = 2, 8
    H_T, H_S = 64, 32
    C = 32  # linear head width

    teacher_LSTM1 = jax.random.normal(ks[0], (B, S, H_T), jnp.float32)
    teacher_LSTM2 = jax.random.normal(ks[1], (B, S, H_T), jnp.float32)
    student_LSTM1 = jax.random.normal(ks[2], (B, S, H_S), jnp.float32)
    student_LSTM2 = jax.random.normal(ks[3], (B, S, H_S), jnp.float32)
    teacher_linear = jax.random.normal(ks[4], (B, C), jnp.float32)
    student_linear = jax.random.normal(ks[5], (B, C), jnp.float32)
    ce_loss = jnp.float32(1.2345)
    alpha = 0.7

    # Base class contract check (abstract forward).
    base = BaseLoss()
    try:
        base(ce_loss, ce_loss)
        raise AssertionError("BaseLoss.forward should be abstract")
    except NotImplementedError:
        pass

    loss_fn = KDSelfSimilarityLoss()
    loss = loss_fn(ce_loss, alpha, teacher_LSTM1, teacher_LSTM2, teacher_linear,
                   student_LSTM1, student_LSTM2, student_linear)
    jax.block_until_ready(loss)

    # Plain-JAX reference.
    def _gram_ref(x):
        m = jnp.mean(x.astype(jnp.float32), axis=0)
        return lax.dot_general(m, m, (((1,), (1,)), ((), ())),
                               preferred_element_type=jnp.float32,
                               precision=lax.Precision.HIGHEST)

    def _l1_ref(a, b):
        return jnp.mean(jnp.abs(a.astype(jnp.float32) - b.astype(jnp.float32)))

    ref = alpha * ce_loss + (1.0 - alpha) * (
        _l1_ref(student_linear, teacher_linear)
        + jnp.mean(jnp.abs(_gram_ref(student_LSTM1) - _gram_ref(teacher_LSTM1)))
        + jnp.mean(jnp.abs(_gram_ref(student_LSTM2) - _gram_ref(teacher_LSTM2))))
    assert jnp.allclose(loss, ref, rtol=5e-2, atol=5e-2), (loss, ref)

    # Path coverage 1: tiled + ragged-tail fused gram/L1 kernel (grid_n > 1, mask).
    big_s = jax.random.normal(ks[6], (130, 64, 256), jnp.float32)
    big_t = jax.random.normal(ks[7], (130, 64, 256), jnp.float32)
    got = _fused_self_similarity_l1(big_s, big_t)
    jax.block_until_ready(got)
    want = jnp.mean(jnp.abs(_gram_ref(big_s) - _gram_ref(big_t)))
    assert jnp.allclose(got, want, rtol=5e-2, atol=5e-2), (got, want)

    # Path coverage 2: lane-dense tiled Pallas L1 kernel (grid_n > 1, mask).
    big_a = jax.random.normal(ks[8], (4095, 512), jnp.float32)
    big_b = jax.random.normal(ks[9], (4095, 512), jnp.float32)
    got_l1 = _l1_mean(big_a, big_b)
    jax.block_until_ready(got_l1)
    want_l1 = _l1_ref(big_a, big_b)
    assert jnp.allclose(got_l1, want_l1, rtol=1e-3, atol=1e-4), (got_l1, want_l1)

    print("KERNEL_OK")
</pallas_src>

<mosaic_0001>
module attributes {stable_mosaic.version = 11 : i64} {
  func.func @kernel(%arg0: i32, %arg1: memref<2x8x32xf32, #tpu.memory_space<vmem>>, %arg2: memref<2x8x64xf32, #tpu.memory_space<vmem>>, %arg3: memref<1x1xf32, #tpu.memory_space<smem>>) attributes {dimension_semantics = [#tpu.dimension_semantics<arbitrary>], iteration_bounds = array<i64: 1>, scalar_prefetch = 0 : i64, scratch_operands = 0 : i64, tpu.core_type = #tpu.core_type<tc>, window_params = [{transform_indices = @transform_0, window_bounds = array<i64: 2, 8, 32>}, {transform_indices = @transform_1, window_bounds = array<i64: 2, 8, 64>}, {transform_indices = @transform_2, window_bounds = array<i64: 1, 1>}]} {
    %c0 = arith.constant 0 : index
    %c0_0 = arith.constant 0 : index
    %c0_1 = arith.constant 0 : index
    %0 = vector.load %arg1[%c0, %c0_0, %c0_1] : memref<2x8x32xf32, #tpu.memory_space<vmem>>, vector<2x8x32xf32>
    %cst = arith.constant dense<0.000000e+00> : vector<8x32xf32>
    %1 = vector.multi_reduction <add>, %0, %cst [0] : vector<2x8x32xf32> to vector<8x32xf32>
    %cst_2 = arith.constant 5.000000e-01 : f32
    %2 = vector.broadcast %cst_2 : f32 to vector<8x32xf32>
    %3 = arith.mulf %1, %2 : vector<8x32xf32>
    %c0_3 = arith.constant 0 : index
    %c0_4 = arith.constant 0 : index
    %c0_5 = arith.constant 0 : index
    %4 = vector.load %arg2[%c0_3, %c0_4, %c0_5] : memref<2x8x64xf32, #tpu.memory_space<vmem>>, vector<2x8x64xf32>
    %cst_6 = arith.constant dense<0.000000e+00> : vector<8x64xf32>
    %5 = vector.multi_reduction <add>, %4, %cst_6 [0] : vector<2x8x64xf32> to vector<8x64xf32>
    %cst_7 = arith.constant 5.000000e-01 : f32
    %6 = vector.broadcast %cst_7 : f32 to vector<8x64xf32>
    %7 = arith.mulf %5, %6 : vector<8x64xf32>
    %cst_8 = arith.constant dense<0.000000e+00> : vector<8x8xf32>
    %8 = tpu.matmul %3, %3, %cst_8 {dimension_numbers = #tpu.dot_dimension_numbers<[1], [1], [0], [0], [0, 0, 1, 0], [], []>, precision = #tpu.contract_precision<fp32>} : vector<8x32xf32>, vector<8x32xf32>, vector<8x8xf32> -> vector<8x8xf32>
    %cst_9 = arith.constant dense<0.000000e+00> : vector<8x8xf32>
    %9 = tpu.matmul %7, %7, %cst_9 {dimension_numbers = #tpu.dot_dimension_numbers<[1], [1], [0], [0], [0, 0, 1, 0], [], []>, precision = #tpu.contract_precision<fp32>} : vector<8x64xf32>, vector<8x64xf32>, vector<8x8xf32> -> vector<8x8xf32>
    %10 = arith.subf %8, %9 : vector<8x8xf32>
    %11 = math.absf %10 : vector<8x8xf32>
    %12 = vector.shape_cast %11 : vector<8x8xf32> to vector<1x8x8xf32>
    %cst_10 = arith.constant dense<0.000000e+00> : vector<1xf32>
    %13 = vector.multi_reduction <add>, %12, %cst_10 [1, 2] : vector<1x8x8xf32> to vector<1xf32>
    %14 = vector.shape_cast %13 : vector<1xf32> to vector<1x1x1xf32>
    %15 = vector.extract %14[0, 0, 0] : f32 from vector<1x1x1xf32>
    %cst_11 = arith.constant 1.562500e-02 : f32
    %16 = arith.mulf %15, %cst_11 : f32
    %c0_12 = arith.constant 0 : index
    %c0_13 = arith.constant 0 : index
    %17 = memref.load %arg3[%c0_12, %c0_13] : memref<1x1xf32, #tpu.memory_space<smem>>
    memref.store %16, %arg3[%c0_12, %c0_13] : memref<1x1xf32, #tpu.memory_space<smem>>
    return
  }
  func.func @transform_0(%arg0: i32) -> (i32, i32, i32) {
    %c0_i32 = arith.constant 0 : i32
    %c0_i32_0 = arith.constant 0 : i32
    %c0_i32_1 = arith.constant 0 : i32
    return %arg0, %c0_i32, %c0_i32_0 : i32, i32, i32
  }
  func.func @transform_1(%arg0: i32) -> (i32, i32, i32) {
    %c0_i32 = arith.constant 0 : i32
    %c0_i32_0 = arith.constant 0 : i32
    %c0_i32_1 = arith.constant 0 : i32
    return %arg0, %c0_i32, %c0_i32_0 : i32, i32, i32
  }
  func.func @transform_2(%arg0: i32) -> (i32, i32) {
    %c0_i32 = arith.constant 0 : i32
    %c0_i32_0 = arith.constant 0 : i32
    %c0_i32_1 = arith.constant 0 : i32
    return %c0_i32, %c0_i32_0 : i32, i32
  }
}

</mosaic_0001>

<llo_original>
// kernel: tpu_custom_call.1
$region0: #{tpu_custom_call.1}
  #allocation0 [shape = 'u32[]', space=smem, size = 0x4, offset = 0x4, fixed_abs, tag = 'smem constant byte address 0x4 - core index']
  #allocation1 [shape = 'u32[144,128]{1,0:T(1,128)}', space=vmem, size = 0x12000, scoped, tag = 'internal scratch']
  %s0 = inlined_call_operand.hbm [shape: f32[2,8,32], index: 0, kind: input, shape index: {}]
  %s1 = inlined_call_operand.hbm [shape: f32[2,8,64], index: 1, kind: input, shape index: {}]
  %s2 = inlined_call_operand.hbm [shape: f32[1,1], index: 2, kind: output, shape index: {}]
  %s3 = sld [smem:[#allocation0]]
  $region26: #{tpu_custom_call.1} parent=0
    _
  %s5 = ssub.s32 1, %s3
  %s6 = scalar_select 0, %s5, %s3
  $region1: #{tpu_custom_call.1} parent=0
    #allocation2 [shape = 'u8[8192]{0}', space=vmem, size = 0x2000, scoped, tag = 'input window, operand 0, single buffered']
    #allocation3 [shape = 's32[1]{0}', space=sflag, size = 0x4, scoped, tag = 'scoped memory for tpu_custom_call.1']
    #allocation4 [shape = 's32[1]{0}', space=sflag, size = 0x4, scoped, tag = 'scoped memory for tpu_custom_call.1']
    #allocation5 [shape = 'u8[8192]{0}', space=vmem, size = 0x2000, scoped, tag = 'input window, operand 1, single buffered']
    #allocation6 [shape = 's32[1]{0}', space=sflag, size = 0x4, scoped, tag = 'scoped memory for tpu_custom_call.1']
    #allocation7 [shape = 'u8[512]{0}', space=smem, size = 0x200, scoped, tag = 'output window, operand 0, single buffered']
    %7 = vsyncpa [#allocation3], 0
    %8 = vsyncpa [#allocation6], 0
    %9 = vsyncpa [#allocation4], 0
    // Predicated region
    $region2: #{tpu_custom_call.1} parent=1 // pred_check
      _
    $region3: #{tpu_custom_call.1} parent=1 // pred_check_branch
      %11 = sbr.rel (0) target = $region5
    $region4: #{tpu_custom_call.1} parent=1 // pred_region
      %s13 = ssub.s32 256, 256
      %14 = vsyncadd [#allocation3], %s13
      %s15 = sshll.u32 [#allocation2], 4
      %s16 = int_to_ptr.vmem [resolvable:$true] %s15
      %21 = dma.hbm_to_vmem [thread:$0]  %s0, 256, %s16, [#allocation3], 128, 128, 8
    $region5: #{tpu_custom_call.1} parent=1 // pred_fallthru
      _
    // Predicated region
    $region6: #{tpu_custom_call.1} parent=1 // pred_check
      _
    $region7: #{tpu_custom_call.1} parent=1 // pred_check_branch
      %23 = sbr.rel (0) target = $region9
    $region8: #{tpu_custom_call.1} parent=1 // pred_region
      %s25 = ssub.s32 256, 256
      %26 = vsyncadd [#allocation6], %s25
      %s27 = sshll.u32 [#allocation5], 4
      %s28 = int_to_ptr.vmem [resolvable:$true] %s27
      %33 = dma.hbm_to_vmem [thread:$0]  %s1, 256, %s28, [#allocation6], 128, 128, 8
    $region9: #{tpu_custom_call.1} parent=1 // pred_fallthru
      _
    // Predicated region
    $region10: #{tpu_custom_call.1} parent=1 // pred_check
      _
    $region11: #{tpu_custom_call.1} parent=1 // pred_check_branch
      %35 = sbr.rel (0) target = $region13
    $region12: #{tpu_custom_call.1} parent=1 // pred_region
      %36 = dma.done [#allocation3], 256
    $region13: #{tpu_custom_call.1} parent=1 // pred_fallthru
      _
    // Predicated region
    $region14: #{tpu_custom_call.1} parent=1 // pred_check
      _
    $region15: #{tpu_custom_call.1} parent=1 // pred_check_branch
      %38 = sbr.rel (0) target = $region17
    $region16: #{tpu_custom_call.1} parent=1 // pred_region
      %39 = dma.done [#allocation6], 256
    $region17: #{tpu_custom_call.1} parent=1 // pred_fallthru
      _
    %v40 = vld [vmem:[#allocation2] sm:$0xff]
    %v41 = vld [vmem:[#allocation2 + $0x8] sm:$0xff]
    %vm42 = vcmask 261120
    %v43 = vsel %vm42, %v40, 0.0
    %v44 = vsel %vm42, %v41, 0.0
    %v45 = vadd.f32 %v43, %v44
    %v46 = vmul.f32 %v45, 0.5
    %v47 = vld [vmem:[#allocation5] sm:$0xff]
    %v48 = vld [vmem:[#allocation5 + $0x8] sm:$0xff]
    %vm49 = vcmask 523264
    %v50 = vsel %vm49, %v47, 0.0
    %v51 = vsel %vm49, %v48, 0.0
    %v52 = vadd.f32 %v50, %v51
    %v53 = vmul.f32 %v52, 0.5
    %v55 = vsel %vm42, %v46, 0
    %57 = vmatprep.subr.mxu0 0.0
    %58 = vmatpush1.xpose.msra.mxu0 0.0
    %59 = vmatprep.subr.mxu0 0.0
    %60 = vmatpush1.xpose.msra.mxu0 0.0
    %61 = vmatprep.subr.mxu0 0.0
    %62 = vmatpush1.xpose.msra.mxu0 0.0
    %63 = vmatprep.subr.mxu0 0.0
    %64 = vmatpush1.xpose.msra.mxu0 0.0
    %65 = vmatprep.subr.mxu0 0.0
    %66 = vmatpush1.xpose.msra.mxu0 0.0
    %67 = vmatprep.subr.mxu0 0.0
    %68 = vmatpush1.xpose.msra.mxu0 0.0
    %69 = vmatprep.subr.mxu0 0.0
    %70 = vmatpush1.xpose.msra.mxu0 0.0
    %71 = vmatprep.subr.mxu0 0.0
    %72 = vmatpush1.xpose.msra.mxu0 0.0
    %73 = vmatprep.subr.mxu0 0.0
    %74 = vmatpush1.xpose.msra.mxu0 0.0
    %75 = vmatprep.subr.mxu0 0.0
    %76 = vmatpush1.xpose.msra.mxu0 0.0
    %77 = vmatprep.subr.mxu0 0.0
    %78 = vmatpush1.xpose.msra.mxu0 0.0
    %79 = vmatprep.subr.mxu0 0.0
    %80 = vmatpush1.xpose.msra.mxu0 0.0
    %81 = vmatprep.subr.mxu0 0.0
    %82 = vmatpush1.xpose.msra.mxu0 0.0
    %83 = vmatprep.subr.mxu0 0.0
    %84 = vmatpush1.xpose.msra.mxu0 0.0
    %85 = vmatprep.subr.mxu0 0.0
    %86 = vmatpush1.xpose.msra.mxu0 0.0
    %87 = vmatprep.subr.mxu0 0.0
    %v88 = vand.u32 %v55, 4294901760
    %89 = vmatpush1.xpose.msra.mxu0 %v88
    %90 = vmatprep.subr.mxu0 0.0
    %91 = vmatpush2.xpose.msra.mxu0 0.0
    %92 = vmatprep.subr.mxu0 0.0
    %93 = vmatpush2.xpose.msra.mxu0 0.0
    %94 = vmatprep.subr.mxu0 0.0
    %95 = vmatpush2.xpose.msra.mxu0 0.0
    %96 = vmatprep.subr.mxu0 0.0
    %97 = vmatpush2.xpose.msra.mxu0 0.0
    %98 = vmatprep.subr.mxu0 0.0
    %99 = vmatpush2.xpose.msra.mxu0 0.0
    %100 = vmatprep.subr.mxu0 0.0
    %101 = vmatpush2.xpose.msra.mxu0 0.0
    %102 = vmatprep.subr.mxu0 0.0
    %103 = vmatpush2.xpose.msra.mxu0 0.0
    %104 = vmatprep.subr.mxu0 0.0
    %105 = vmatpush2.xpose.msra.mxu0 0.0
    %106 = vmatprep.subr.mxu0 0.0
    %107 = vmatpush2.xpose.msra.mxu0 0.0
    %108 = vmatprep.subr.mxu0 0.0
    %109 = vmatpush2.xpose.msra.mxu0 0.0
    %110 = vmatprep.subr.mxu0 0.0
    %111 = vmatpush2.xpose.msra.mxu0 0.0
    %112 = vmatprep.subr.mxu0 0.0
    %113 = vmatpush2.xpose.msra.mxu0 0.0
    %114 = vmatprep.subr.mxu0 0.0
    %115 = vmatpush2.xpose.msra.mxu0 0.0
    %116 = vmatprep.subr.mxu0 0.0
    %117 = vmatpush2.xpose.msra.mxu0 0.0
    %118 = vmatprep.subr.mxu0 0.0
    %119 = vmatpush2.xpose.msra.mxu0 0.0
    %120 = vmatprep.subr.mxu0 0.0
    %121 = vmatpush2.xpose.msra.mxu0 0.0
    %122 = vmatprep.mubr.f32.mxu0 0.0
    %v123 = vand.u32 %v55, 4294901760
    %v124 = vsub.f32 %v55, %v123
    %v125 = vand.u32 %v124, 4294901760
    %v126 = vsub.f32 %v124, %v125
    %v127 = vand.u32 %v126, 4294901760
    %128 = vmatmul.mubr.f32.gmra.mxu0 %v127
    %v129 = vpop.f32.mrf.mxu0
    %v130 = vadd.f32 0.0, %v129
    %v131 = vpop.f32.mrf.mxu0
    %132 = vdwg.mxu0
    %133 = vmatprep.subr.mxu0 0.0
    %134 = vmatpush1.xpose.msra.mxu0 0.0
    %135 = vmatprep.subr.mxu0 0.0
    %136 = vmatpush1.xpose.msra.mxu0 0.0
    %137 = vmatprep.subr.mxu0 0.0
    %138 = vmatpush1.xpose.msra.mxu0 0.0
    %139 = vmatprep.subr.mxu0 0.0
    %140 = vmatpush1.xpose.msra.mxu0 0.0
    %141 = vmatprep.subr.mxu0 0.0
    %142 = vmatpush1.xpose.msra.mxu0 0.0
    %143 = vmatprep.subr.mxu0 0.0
    %144 = vmatpush1.xpose.msra.mxu0 0.0
    %145 = vmatprep.subr.mxu0 0.0
    %146 = vmatpush1.xpose.msra.mxu0 0.0
    %147 = vmatprep.subr.mxu0 0.0
    %148 = vmatpush1.xpose.msra.mxu0 0.0
    %149 = vmatprep.subr.mxu0 0.0
    %150 = vmatpush1.xpose.msra.mxu0 0.0
    %151 = vmatprep.subr.mxu0 0.0
    %152 = vmatpush1.xpose.msra.mxu0 0.0
    %153 = vmatprep.subr.mxu0 0.0
    %154 = vmatpush1.xpose.msra.mxu0 0.0
    %155 = vmatprep.subr.mxu0 0.0
    %156 = vmatpush1.xpose.msra.mxu0 0.0
    %157 = vmatprep.subr.mxu0 0.0
    %158 = vmatpush1.xpose.msra.mxu0 0.0
    %159 = vmatprep.subr.mxu0 0.0
    %160 = vmatpush1.xpose.msra.mxu0 0.0
    %161 = vmatprep.subr.mxu0 0.0
    %162 = vmatpush1.xpose.msra.mxu0 0.0
    %163 = vmatprep.subr.mxu0 0.0
    %v164 = vand.u32 %v55, 4294901760
    %v165 = vsub.f32 %v55, %v164
    %v166 = vand.u32 %v165, 4294901760
    %v167 = vsub.f32 %v165, %v166
    %v168 = vand.u32 %v167, 4294901760
    %169 = vmatpush1.xpose.msra.mxu0 %v168
    %170 = vmatprep.subr.mxu0 0.0
    %171 = vmatpush2.xpose.msra.mxu0 0.0
    %172 = vmatprep.subr.mxu0 0.0
    %173 = vmatpush2.xpose.msra.mxu0 0.0
    %174 = vmatprep.subr.mxu0 0.0
    %175 = vmatpush2.xpose.msra.mxu0 0.0
    %176 = vmatprep.subr.mxu0 0.0
    %177 = vmatpush2.xpose.msra.mxu0 0.0
    %178 = vmatprep.subr.mxu0 0.0
    %179 = vmatpush2.xpose.msra.mxu0 0.0
    %180 = vmatprep.subr.mxu0 0.0
    %181 = vmatpush2.xpose.msra.mxu0 0.0
    %182 = vmatprep.subr.mxu0 0.0
    %183 = vmatpush2.xpose.msra.mxu0 0.0
    %184 = vmatprep.subr.mxu0 0.0
    %185 = vmatpush2.xpose.msra.mxu0 0.0
    %186 = vmatprep.subr.mxu0 0.0
    %187 = vmatpush2.xpose.msra.mxu0 0.0
    %188 = vmatprep.subr.mxu0 0.0
    %189 = vmatpush2.xpose.msra.mxu0 0.0
    %190 = vmatprep.subr.mxu0 0.0
    %191 = vmatpush2.xpose.msra.mxu0 0.0
    %192 = vmatprep.subr.mxu0 0.0
    %193 = vmatpush2.xpose.msra.mxu0 0.0
    %194 = vmatprep.subr.mxu0 0.0
    %195 = vmatpush2.xpose.msra.mxu0 0.0
    %196 = vmatprep.subr.mxu0 0.0
    %197 = vmatpush2.xpose.msra.mxu0 0.0
    %198 = vmatprep.subr.mxu0 0.0
    %199 = vmatpush2.xpose.msra.mxu0 0.0
    %200 = vmatprep.subr.mxu0 0.0
    %201 = vmatpush2.xpose.msra.mxu0 0.0
    %202 = vmatprep.mubr.f32.mxu0 0.0
    %v203 = vand.u32 %v55, 4294901760
    %204 = vmatmul.mubr.f32.gmra.mxu0 %v203
    %v205 = vpop.f32.mrf.mxu0
    %v206 = vadd.f32 %v130, %v205
    %v207 = vpop.f32.mrf.mxu0
    %208 = vdwg.mxu0
    %209 = vmatprep.subr.mxu0 0.0
    %210 = vmatpush1.xpose.msra.mxu0 0.0
    %211 = vmatprep.subr.mxu0 0.0
    %212 = vmatpush1.xpose.msra.mxu0 0.0
    %213 = vmatprep.subr.mxu0 0.0
    %214 = vmatpush1.xpose.msra.mxu0 0.0
    %215 = vmatprep.subr.mxu0 0.0
    %216 = vmatpush1.xpose.msra.mxu0 0.0
    %217 = vmatprep.subr.mxu0 0.0
    %218 = vmatpush1.xpose.msra.mxu0 0.0
    %219 = vmatprep.subr.mxu0 0.0
    %220 = vmatpush1.xpose.msra.mxu0 0.0
    %221 = vmatprep.subr.mxu0 0.0
    %222 = vmatpush1.xpose.msra.mxu0 0.0
    %223 = vmatprep.subr.mxu0 0.0
    %224 = vmatpush1.xpose.msra.mxu0 0.0
    %225 = vmatprep.subr.mxu0 0.0
    %226 = vmatpush1.xpose.msra.mxu0 0.0
    %227 = vmatprep.subr.mxu0 0.0
    %228 = vmatpush1.xpose.msra.mxu0 0.0
    %229 = vmatprep.subr.mxu0 0.0
    %230 = vmatpush1.xpose.msra.mxu0 0.0
    %231 = vmatprep.subr.mxu0 0.0
    %232 = vmatpush1.xpose.msra.mxu0 0.0
    %233 = vmatprep.subr.mxu0 0.0
    %234 = vmatpush1.xpose.msra.mxu0 0.0
    %235 = vmatprep.subr.mxu0 0.0
    %236 = vmatpush1.xpose.msra.mxu0 0.0
    %237 = vmatprep.subr.mxu0 0.0
    %238 = vmatpush1.xpose.msra.mxu0 0.0
    %239 = vmatprep.subr.mxu0 0.0
    %v240 = vand.u32 %v55, 4294901760
    %v241 = vsub.f32 %v55, %v240
    %242 = vmatpush1.xpose.msra.mxu0 %v241
    %243 = vmatprep.subr.mxu0 0.0
    %244 = vmatpush2.xpose.msra.mxu0 0.0
    %245 = vmatprep.subr.mxu0 0.0
    %246 = vmatpush2.xpose.msra.mxu0 0.0
    %247 = vmatprep.subr.mxu0 0.0
    %248 = vmatpush2.xpose.msra.mxu0 0.0
    %249 = vmatprep.subr.mxu0 0.0
    %250 = vmatpush2.xpose.msra.mxu0 0.0
    %251 = vmatprep.subr.mxu0 0.0
    %252 = vmatpush2.xpose.msra.mxu0 0.0
    %253 = vmatprep.subr.mxu0 0.0
    %254 = vmatpush2.xpose.msra.mxu0 0.0
    %255 = vmatprep.subr.mxu0 0.0
    %256 = vmatpush2.xpose.msra.mxu0 0.0
    %257 = vmatprep.subr.mxu0 0.0
    %258 = vmatpush2.xpose.msra.mxu0 0.0
    %259 = vmatprep.subr.mxu0 0.0
    %260 = vmatpush2.xpose.msra.mxu0 0.0
    %261 = vmatprep.subr.mxu0 0.0
    %262 = vmatpush2.xpose.msra.mxu0 0.0
    %263 = vmatprep.subr.mxu0 0.0
    %264 = vmatpush2.xpose.msra.mxu0 0.0
    %265 = vmatprep.subr.mxu0 0.0
    %266 = vmatpush2.xpose.msra.mxu0 0.0
    %267 = vmatprep.subr.mxu0 0.0
    %268 = vmatpush2.xpose.msra.mxu0 0.0
    %269 = vmatprep.subr.mxu0 0.0
    %270 = vmatpush2.xpose.msra.mxu0 0.0
    %271 = vmatprep.subr.mxu0 0.0
    %272 = vmatpush2.xpose.msra.mxu0 0.0
    %273 = vmatprep.subr.mxu0 0.0
    %274 = vmatpush2.xpose.msra.mxu0 0.0
    %275 = vmatprep.mubr.f32.mxu0 0.0
    %v276 = vand.u32 %v55, 4294901760
    %v277 = vsub.f32 %v55, %v276
    %278 = vmatmul.mubr.f32.gmra.mxu0 %v277
    %v279 = vpop.f32.mrf.mxu0
    %v280 = vadd.f32 %v206, %v279
    %v281 = vpop.f32.mrf.mxu0
    %282 = vdwg.mxu0
    %283 = vmatprep.subr.mxu0 0.0
    %284 = vmatpush1.xpose.msra.mxu0 0.0
    %285 = vmatprep.subr.mxu0 0.0
    %286 = vmatpush1.xpose.msra.mxu0 0.0
    %287 = vmatprep.subr.mxu0 0.0
    %288 = vmatpush1.xpose.msra.mxu0 0.0
    %289 = vmatprep.subr.mxu0 0.0
    %290 = vmatpush1.xpose.msra.mxu0 0.0
    %291 = vmatprep.subr.mxu0 0.0
    %292 = vmatpush1.xpose.msra.mxu0 0.0
    %293 = vmatprep.subr.mxu0 0.0
    %294 = vmatpush1.xpose.msra.mxu0 0.0
    %295 = vmatprep.subr.mxu0 0.0
    %296 = vmatpush1.xpose.msra.mxu0 0.0
    %297 = vmatprep.subr.mxu0 0.0
    %298 = vmatpush1.xpose.msra.mxu0 0.0
    %299 = vmatprep.subr.mxu0 0.0
    %300 = vmatpush1.xpose.msra.mxu0 0.0
    %301 = vmatprep.subr.mxu0 0.0
    %302 = vmatpush1.xpose.msra.mxu0 0.0
    %303 = vmatprep.subr.mxu0 0.0
    %304 = vmatpush1.xpose.msra.mxu0 0.0
    %305 = vmatprep.subr.mxu0 0.0
    %306 = vmatpush1.xpose.msra.mxu0 0.0
    %307 = vmatprep.subr.mxu0 0.0
    %308 = vmatpush1.xpose.msra.mxu0 0.0
    %309 = vmatprep.subr.mxu0 0.0
    %310 = vmatpush1.xpose.msra.mxu0 0.0
    %311 = vmatprep.subr.mxu0 0.0
    %312 = vmatpush1.xpose.msra.mxu0 0.0
    %313 = vmatprep.subr.mxu0 0.0
    %v314 = vand.u32 %v55, 4294901760
    %315 = vmatpush1.xpose.msra.mxu0 %v314
    %316 = vmatprep.subr.mxu0 0.0
    %317 = vmatpush2.xpose.msra.mxu0 0.0
    %318 = vmatprep.subr.mxu0 0.0
    %319 = vmatpush2.xpose.msra.mxu0 0.0
    %320 = vmatprep.subr.mxu0 0.0
    %321 = vmatpush2.xpose.msra.mxu0 0.0
    %322 = vmatprep.subr.mxu0 0.0
    %323 = vmatpush2.xpose.msra.mxu0 0.0
    %324 = vmatprep.subr.mxu0 0.0
    %325 = vmatpush2.xpose.msra.mxu0 0.0
    %326 = vmatprep.subr.mxu0 0.0
    %327 = vmatpush2.xpose.msra.mxu0 0.0
    %328 = vmatprep.subr.mxu0 0.0
    %329 = vmatpush2.xpose.msra.mxu0 0.0
    %330 = vmatprep.subr.mxu0 0.0
    %331 = vmatpush2.xpose.msra.mxu0 0.0
    %332 = vmatprep.subr.mxu0 0.0
    %333 = vmatpush2.xpose.msra.mxu0 0.0
    %334 = vmatprep.subr.mxu0 0.0
    %335 = vmatpush2.xpose.msra.mxu0 0.0
    %336 = vmatprep.subr.mxu0 0.0
    %337 = vmatpush2.xpose.msra.mxu0 0.0
    %338 = vmatprep.subr.mxu0 0.0
    %339 = vmatpush2.xpose.msra.mxu0 0.0
    %340 = vmatprep.subr.mxu0 0.0
    %341 = vmatpush2.xpose.msra.mxu0 0.0
    %342 = vmatprep.subr.mxu0 0.0
    %343 = vmatpush2.xpose.msra.mxu0 0.0
    %344 = vmatprep.subr.mxu0 0.0
    %345 = vmatpush2.xpose.msra.mxu0 0.0
    %346 = vmatprep.subr.mxu0 0.0
    %347 = vmatpush2.xpose.msra.mxu0 0.0
    %348 = vmatprep.mubr.f32.mxu0 0.0
    %v349 = vand.u32 %v55, 4294901760
    %v350 = vsub.f32 %v55, %v349
    %v351 = vand.u32 %v350, 4294901760
    %352 = vmatmul.mubr.f32.gmra.mxu0 %v351
    %v353 = vpop.f32.mrf.mxu0
    %v354 = vadd.f32 %v280, %v353
    %v355 = vpop.f32.mrf.mxu0
    %356 = vdwg.mxu0
    %357 = vmatprep.subr.mxu0 0.0
    %358 = vmatpush1.xpose.msra.mxu0 0.0
    %359 = vmatprep.subr.mxu0 0.0
    %360 = vmatpush1.xpose.msra.mxu0 0.0
    %361 = vmatprep.subr.mxu0 0.0
    %362 = vmatpush1.xpose.msra.mxu0 0.0
    %363 = vmatprep.subr.mxu0 0.0
    %364 = vmatpush1.xpose.msra.mxu0 0.0
    %365 = vmatprep.subr.mxu0 0.0
    %366 = vmatpush1.xpose.msra.mxu0 0.0
    %367 = vmatprep.subr.mxu0 0.0
    %368 = vmatpush1.xpose.msra.mxu0 0.0
    %369 = vmatprep.subr.mxu0 0.0
    %370 = vmatpush1.xpose.msra.mxu0 0.0
    %371 = vmatprep.subr.mxu0 0.0
    %372 = vmatpush1.xpose.msra.mxu0 0.0
    %373 = vmatprep.subr.mxu0 0.0
    %374 = vmatpush1.xpose.msra.mxu0 0.0
    %375 = vmatprep.subr.mxu0 0.0
    %376 = vmatpush1.xpose.msra.mxu0 0.0
    %377 = vmatprep.subr.mxu0 0.0
    %378 = vmatpush1.xpose.msra.mxu0 0.0
    %379 = vmatprep.subr.mxu0 0.0
    %380 = vmatpush1.xpose.msra.mxu0 0.0
    %381 = vmatprep.subr.mxu0 0.0
    %382 = vmatpush1.xpose.msra.mxu0 0.0
    %383 = vmatprep.subr.mxu0 0.0
    %384 = vmatpush1.xpose.msra.mxu0 0.0
    %385 = vmatprep.subr.mxu0 0.0
    %386 = vmatpush1.xpose.msra.mxu0 0.0
    %387 = vmatprep.subr.mxu0 0.0
    %v388 = vand.u32 %v55, 4294901760
    %v389 = vsub.f32 %v55, %v388
    %v390 = vand.u32 %v389, 4294901760
    %391 = vmatpush1.xpose.msra.mxu0 %v390
    %392 = vmatprep.subr.mxu0 0.0
    %393 = vmatpush2.xpose.msra.mxu0 0.0
    %394 = vmatprep.subr.mxu0 0.0
    %395 = vmatpush2.xpose.msra.mxu0 0.0
    %396 = vmatprep.subr.mxu0 0.0
    %397 = vmatpush2.xpose.msra.mxu0 0.0
    %398 = vmatprep.subr.mxu0 0.0
    %399 = vmatpush2.xpose.msra.mxu0 0.0
    %400 = vmatprep.subr.mxu0 0.0
    %401 = vmatpush2.xpose.msra.mxu0 0.0
    %402 = vmatprep.subr.mxu0 0.0
    %403 = vmatpush2.xpose.msra.mxu0 0.0
    %404 = vmatprep.subr.mxu0 0.0
    %405 = vmatpush2.xpose.msra.mxu0 0.0
    %406 = vmatprep.subr.mxu0 0.0
    %407 = vmatpush2.xpose.msra.mxu0 0.0
    %408 = vmatprep.subr.mxu0 0.0
    %409 = vmatpush2.xpose.msra.mxu0 0.0
    %410 = vmatprep.subr.mxu0 0.0
    %411 = vmatpush2.xpose.msra.mxu0 0.0
    %412 = vmatprep.subr.mxu0 0.0
    %413 = vmatpush2.xpose.msra.mxu0 0.0
    %414 = vmatprep.subr.mxu0 0.0
    %415 = vmatpush2.xpose.msra.mxu0 0.0
    %416 = vmatprep.subr.mxu0 0.0
    %417 = vmatpush2.xpose.msra.mxu0 0.0
    %418 = vmatprep.subr.mxu0 0.0
    %419 = vmatpush2.xpose.msra.mxu0 0.0
    %420 = vmatprep.subr.mxu0 0.0
    %421 = vmatpush2.xpose.msra.mxu0 0.0
    %422 = vmatprep.subr.mxu0 0.0
    %423 = vmatpush2.xpose.msra.mxu0 0.0
    %424 = vmatprep.mubr.f32.mxu0 0.0
    %v425 = vand.u32 %v55, 4294901760
    %426 = vmatmul.mubr.f32.gmra.mxu0 %v425
    %v427 = vpop.f32.mrf.mxu0
    %v428 = vadd.f32 %v354, %v427
    %v429 = vpop.f32.mrf.mxu0
    %430 = vdwg.mxu0
    %431 = vmatprep.subr.mxu0 0.0
    %432 = vmatpush1.xpose.msra.mxu0 0.0
    %433 = vmatprep.subr.mxu0 0.0
    %434 = vmatpush1.xpose.msra.mxu0 0.0
    %435 = vmatprep.subr.mxu0 0.0
    %436 = vmatpush1.xpose.msra.mxu0 0.0
    %437 = vmatprep.subr.mxu0 0.0
    %438 = vmatpush1.xpose.msra.mxu0 0.0
    %439 = vmatprep.subr.mxu0 0.0
    %440 = vmatpush1.xpose.msra.mxu0 0.0
    %441 = vmatprep.subr.mxu0 0.0
    %442 = vmatpush1.xpose.msra.mxu0 0.0
    %443 = vmatprep.subr.mxu0 0.0
    %444 = vmatpush1.xpose.msra.mxu0 0.0
    %445 = vmatprep.subr.mxu0 0.0
    %446 = vmatpush1.xpose.msra.mxu0 0.0
    %447 = vmatprep.subr.mxu0 0.0
    %448 = vmatpush1.xpose.msra.mxu0 0.0
    %449 = vmatprep.subr.mxu0 0.0
    %450 = vmatpush1.xpose.msra.mxu0 0.0
    %451 = vmatprep.subr.mxu0 0.0
    %452 = vmatpush1.xpose.msra.mxu0 0.0
    %453 = vmatprep.subr.mxu0 0.0
    %454 = vmatpush1.xpose.msra.mxu0 0.0
    %455 = vmatprep.subr.mxu0 0.0
    %456 = vmatpush1.xpose.msra.mxu0 0.0
    %457 = vmatprep.subr.mxu0 0.0
    %458 = vmatpush1.xpose.msra.mxu0 0.0
    %459 = vmatprep.subr.mxu0 0.0
    %460 = vmatpush1.xpose.msra.mxu0 0.0
    %461 = vmatprep.subr.mxu0 0.0
    %v462 = vand.u32 %v55, 4294901760
    %463 = vmatpush1.xpose.msra.mxu0 %v462
    %464 = vmatprep.subr.mxu0 0.0
    %465 = vmatpush2.xpose.msra.mxu0 0.0
    %466 = vmatprep.subr.mxu0 0.0
    %467 = vmatpush2.xpose.msra.mxu0 0.0
    %468 = vmatprep.subr.mxu0 0.0
    %469 = vmatpush2.xpose.msra.mxu0 0.0
    %470 = vmatprep.subr.mxu0 0.0
    %471 = vmatpush2.xpose.msra.mxu0 0.0
    %472 = vmatprep.subr.mxu0 0.0
    %473 = vmatpush2.xpose.msra.mxu0 0.0
    %474 = vmatprep.subr.mxu0 0.0
    %475 = vmatpush2.xpose.msra.mxu0 0.0
    %476 = vmatprep.subr.mxu0 0.0
    %477 = vmatpush2.xpose.msra.mxu0 0.0
    %478 = vmatprep.subr.mxu0 0.0
    %479 = vmatpush2.xpose.msra.mxu0 0.0
    %480 = vmatprep.subr.mxu0 0.0
    %481 = vmatpush2.xpose.msra.mxu0 0.0
    %482 = vmatprep.subr.mxu0 0.0
    %483 = vmatpush2.xpose.msra.mxu0 0.0
    %484 = vmatprep.subr.mxu0 0.0
    %485 = vmatpush2.xpose.msra.mxu0 0.0
    %486 = vmatprep.subr.mxu0 0.0
    %487 = vmatpush2.xpose.msra.mxu0 0.0
    %488 = vmatprep.subr.mxu0 0.0
    %489 = vmatpush2.xpose.msra.mxu0 0.0
    %490 = vmatprep.subr.mxu0 0.0
    %491 = vmatpush2.xpose.msra.mxu0 0.0
    %492 = vmatprep.subr.mxu0 0.0
    %493 = vmatpush2.xpose.msra.mxu0 0.0
    %494 = vmatprep.subr.mxu0 0.0
    %495 = vmatpush2.xpose.msra.mxu0 0.0
    %496 = vmatprep.mubr.f32.mxu0 0.0
    %v497 = vand.u32 %v55, 4294901760
    %498 = vmatmul.mubr.f32.gmra.mxu0 %v497
    %v499 = vpop.f32.mrf.mxu0
    %v500 = vadd.f32 %v428, %v499
    %v501 = vpop.f32.mrf.mxu0
    %502 = vdwg.mxu0
    %v504 = vsel %vm49, %v53, 0
    %506 = vmatprep.subr.mxu0 0.0
    %507 = vmatpush1.xpose.msra.mxu0 0.0
    %508 = vmatprep.subr.mxu0 0.0
    %509 = vmatpush1.xpose.msra.mxu0 0.0
    %510 = vmatprep.subr.mxu0 0.0
    %511 = vmatpush1.xpose.msra.mxu0 0.0
    %512 = vmatprep.subr.mxu0 0.0
    %513 = vmatpush1.xpose.msra.mxu0 0.0
    %514 = vmatprep.subr.mxu0 0.0
    %515 = vmatpush1.xpose.msra.mxu0 0.0
    %516 = vmatprep.subr.mxu0 0.0
    %517 = vmatpush1.xpose.msra.mxu0 0.0
    %518 = vmatprep.subr.mxu0 0.0
    %519 = vmatpush1.xpose.msra.mxu0 0.0
    %520 = vmatprep.subr.mxu0 0.0
    %521 = vmatpush1.xpose.msra.mxu0 0.0
    %522 = vmatprep.subr.mxu0 0.0
    %523 = vmatpush1.xpose.msra.mxu0 0.0
    %524 = vmatprep.subr.mxu0 0.0
    %525 = vmatpush1.xpose.msra.mxu0 0.0
    %526 = vmatprep.subr.mxu0 0.0
    %527 = vmatpush1.xpose.msra.mxu0 0.0
    %528 = vmatprep.subr.mxu0 0.0
    %529 = vmatpush1.xpose.msra.mxu0 0.0
    %530 = vmatprep.subr.mxu0 0.0
    %531 = vmatpush1.xpose.msra.mxu0 0.0
    %532 = vmatprep.subr.mxu0 0.0
    %533 = vmatpush1.xpose.msra.mxu0 0.0
    %534 = vmatprep.subr.mxu0 0.0
    %535 = vmatpush1.xpose.msra.mxu0 0.0
    %536 = vmatprep.subr.mxu0 0.0
    %v537 = vand.u32 %v504, 4294901760
    %538 = vmatpush1.xpose.msra.mxu0 %v537
    %539 = vmatprep.subr.mxu0 0.0
    %540 = vmatpush2.xpose.msra.mxu0 0.0
    %541 = vmatprep.subr.mxu0 0.0
    %542 = vmatpush2.xpose.msra.mxu0 0.0
    %543 = vmatprep.subr.mxu0 0.0
    %544 = vmatpush2.xpose.msra.mxu0 0.0
    %545 = vmatprep.subr.mxu0 0.0
    %546 = vmatpush2.xpose.msra.mxu0 0.0
    %547 = vmatprep.subr.mxu0 0.0
    %548 = vmatpush2.xpose.msra.mxu0 0.0
    %549 = vmatprep.subr.mxu0 0.0
    %550 = vmatpush2.xpose.msra.mxu0 0.0
    %551 = vmatprep.subr.mxu0 0.0
    %552 = vmatpush2.xpose.msra.mxu0 0.0
    %553 = vmatprep.subr.mxu0 0.0
    %554 = vmatpush2.xpose.msra.mxu0 0.0
    %555 = vmatprep.subr.mxu0 0.0
    %556 = vmatpush2.xpose.msra.mxu0 0.0
    %557 = vmatprep.subr.mxu0 0.0
    %558 = vmatpush2.xpose.msra.mxu0 0.0
    %559 = vmatprep.subr.mxu0 0.0
    %560 = vmatpush2.xpose.msra.mxu0 0.0
    %561 = vmatprep.subr.mxu0 0.0
    %562 = vmatpush2.xpose.msra.mxu0 0.0
    %563 = vmatprep.subr.mxu0 0.0
    %564 = vmatpush2.xpose.msra.mxu0 0.0
    %565 = vmatprep.subr.mxu0 0.0
    %566 = vmatpush2.xpose.msra.mxu0 0.0
    %567 = vmatprep.subr.mxu0 0.0
    %568 = vmatpush2.xpose.msra.mxu0 0.0
    %569 = vmatprep.subr.mxu0 0.0
    %570 = vmatpush2.xpose.msra.mxu0 0.0
    %571 = vmatprep.mubr.f32.mxu0 0.0
    %v572 = vand.u32 %v504, 4294901760
    %v573 = vsub.f32 %v504, %v572
    %v574 = vand.u32 %v573, 4294901760
    %v575 = vsub.f32 %v573, %v574
    %v576 = vand.u32 %v575, 4294901760
    %577 = vmatmul.mubr.f32.gmra.mxu0 %v576
    %v578 = vpop.f32.mrf.mxu0
    %v579 = vadd.f32 0.0, %v578
    %v580 = vpop.f32.mrf.mxu0
    %581 = vdwg.mxu0
    %582 = vmatprep.subr.mxu0 0.0
    %583 = vmatpush1.xpose.msra.mxu0 0.0
    %584 = vmatprep.subr.mxu0 0.0
    %585 = vmatpush1.xpose.msra.mxu0 0.0
    %586 = vmatprep.subr.mxu0 0.0
    %587 = vmatpush1.xpose.msra.mxu0 0.0
    %588 = vmatprep.subr.mxu0 0.0
    %589 = vmatpush1.xpose.msra.mxu0 0.0
    %590 = vmatprep.subr.mxu0 0.0
    %591 = vmatpush1.xpose.msra.mxu0 0.0
    %592 = vmatprep.subr.mxu0 0.0
    %593 = vmatpush1.xpose.msra.mxu0 0.0
    %594 = vmatprep.subr.mxu0 0.0
    %595 = vmatpush1.xpose.msra.mxu0 0.0
    %596 = vmatprep.subr.mxu0 0.0
    %597 = vmatpush1.xpose.msra.mxu0 0.0
    %598 = vmatprep.subr.mxu0 0.0
    %599 = vmatpush1.xpose.msra.mxu0 0.0
    %600 = vmatprep.subr.mxu0 0.0
    %601 = vmatpush1.xpose.msra.mxu0 0.0
    %602 = vmatprep.subr.mxu0 0.0
    %603 = vmatpush1.xpose.msra.mxu0 0.0
    %604 = vmatprep.subr.mxu0 0.0
    %605 = vmatpush1.xpose.msra.mxu0 0.0
    %606 = vmatprep.subr.mxu0 0.0
    %607 = vmatpush1.xpose.msra.mxu0 0.0
    %608 = vmatprep.subr.mxu0 0.0
    %609 = vmatpush1.xpose.msra.mxu0 0.0
    %610 = vmatprep.subr.mxu0 0.0
    %611 = vmatpush1.xpose.msra.mxu0 0.0
    %612 = vmatprep.subr.mxu0 0.0
    %v613 = vand.u32 %v504, 4294901760
    %v614 = vsub.f32 %v504, %v613
    %v615 = vand.u32 %v614, 4294901760
    %v616 = vsub.f32 %v614, %v615
    %v617 = vand.u32 %v616, 4294901760
    %618 = vmatpush1.xpose.msra.mxu0 %v617
    %619 = vmatprep.subr.mxu0 0.0
    %620 = vmatpush2.xpose.msra.mxu0 0.0
    %621 = vmatprep.subr.mxu0 0.0
    %622 = vmatpush2.xpose.msra.mxu0 0.0
    %623 = vmatprep.subr.mxu0 0.0
    %624 = vmatpush2.xpose.msra.mxu0 0.0
    %625 = vmatprep.subr.mxu0 0.0
    %626 = vmatpush2.xpose.msra.mxu0 0.0
    %627 = vmatprep.subr.mxu0 0.0
    %628 = vmatpush2.xpose.msra.mxu0 0.0
    %629 = vmatprep.subr.mxu0 0.0
    %630 = vmatpush2.xpose.msra.mxu0 0.0
    %631 = vmatprep.subr.mxu0 0.0
    %632 = vmatpush2.xpose.msra.mxu0 0.0
    %633 = vmatprep.subr.mxu0 0.0
    %634 = vmatpush2.xpose.msra.mxu0 0.0
    %635 = vmatprep.subr.mxu0 0.0
    %636 = vmatpush2.xpose.msra.mxu0 0.0
    %637 = vmatprep.subr.mxu0 0.0
    %638 = vmatpush2.xpose.msra.mxu0 0.0
    %639 = vmatprep.subr.mxu0 0.0
    %640 = vmatpush2.xpose.msra.mxu0 0.0
    %641 = vmatprep.subr.mxu0 0.0
    %642 = vmatpush2.xpose.msra.mxu0 0.0
    %643 = vmatprep.subr.mxu0 0.0
    %644 = vmatpush2.xpose.msra.mxu0 0.0
    %645 = vmatprep.subr.mxu0 0.0
    %646 = vmatpush2.xpose.msra.mxu0 0.0
    %647 = vmatprep.subr.mxu0 0.0
    %648 = vmatpush2.xpose.msra.mxu0 0.0
    %649 = vmatprep.subr.mxu0 0.0
    %650 = vmatpush2.xpose.msra.mxu0 0.0
    %651 = vmatprep.mubr.f32.mxu0 0.0
    %v652 = vand.u32 %v504, 4294901760
    %653 = vmatmul.mubr.f32.gmra.mxu0 %v652
    %v654 = vpop.f32.mrf.mxu0
    %v655 = vadd.f32 %v579, %v654
    %v656 = vpop.f32.mrf.mxu0
    %657 = vdwg.mxu0
    %658 = vmatprep.subr.mxu0 0.0
    %659 = vmatpush1.xpose.msra.mxu0 0.0
    %660 = vmatprep.subr.mxu0 0.0
    %661 = vmatpush1.xpose.msra.mxu0 0.0
    %662 = vmatprep.subr.mxu0 0.0
    %663 = vmatpush1.xpose.msra.mxu0 0.0
    %664 = vmatprep.subr.mxu0 0.0
    %665 = vmatpush1.xpose.msra.mxu0 0.0
    %666 = vmatprep.subr.mxu0 0.0
    %667 = vmatpush1.xpose.msra.mxu0 0.0
    %668 = vmatprep.subr.mxu0 0.0
    %669 = vmatpush1.xpose.msra.mxu0 0.0
    %670 = vmatprep.subr.mxu0 0.0
    %671 = vmatpush1.xpose.msra.mxu0 0.0
    %672 = vmatprep.subr.mxu0 0.0
    %673 = vmatpush1.xpose.msra.mxu0 0.0
    %674 = vmatprep.subr.mxu0 0.0
    %675 = vmatpush1.xpose.msra.mxu0 0.0
    %676 = vmatprep.subr.mxu0 0.0
    %677 = vmatpush1.xpose.msra.mxu0 0.0
    %678 = vmatprep.subr.mxu0 0.0
    %679 = vmatpush1.xpose.msra.mxu0 0.0
    %680 = vmatprep.subr.mxu0 0.0
    %681 = vmatpush1.xpose.msra.mxu0 0.0
    %682 = vmatprep.subr.mxu0 0.0
    %683 = vmatpush1.xpose.msra.mxu0 0.0
    %684 = vmatprep.subr.mxu0 0.0
    %685 = vmatpush1.xpose.msra.mxu0 0.0
    %686 = vmatprep.subr.mxu0 0.0
    %687 = vmatpush1.xpose.msra.mxu0 0.0
    %688 = vmatprep.subr.mxu0 0.0
    %v689 = vand.u32 %v504, 4294901760
    %v690 = vsub.f32 %v504, %v689
    %691 = vmatpush1.xpose.msra.mxu0 %v690
    %692 = vmatprep.subr.mxu0 0.0
    %693 = vmatpush2.xpose.msra.mxu0 0.0
    %694 = vmatprep.subr.mxu0 0.0
    %695 = vmatpush2.xpose.msra.mxu0 0.0
    %696 = vmatprep.subr.mxu0 0.0
    %697 = vmatpush2.xpose.msra.mxu0 0.0
    %698 = vmatprep.subr.mxu0 0.0
    %699 = vmatpush2.xpose.msra.mxu0 0.0
    %700 = vmatprep.subr.mxu0 0.0
    %701 = vmatpush2.xpose.msra.mxu0 0.0
    %702 = vmatprep.subr.mxu0 0.0
    %703 = vmatpush2.xpose.msra.mxu0 0.0
    %704 = vmatprep.subr.mxu0 0.0
    %705 = vmatpush2.xpose.msra.mxu0 0.0
    %706 = vmatprep.subr.mxu0 0.0
    %707 = vmatpush2.xpose.msra.mxu0 0.0
    %708 = vmatprep.subr.mxu0 0.0
    %709 = vmatpush2.xpose.msra.mxu0 0.0
    %710 = vmatprep.subr.mxu0 0.0
    %711 = vmatpush2.xpose.msra.mxu0 0.0
    %712 = vmatprep.subr.mxu0 0.0
    %713 = vmatpush2.xpose.msra.mxu0 0.0
    %714 = vmatprep.subr.mxu0 0.0
    %715 = vmatpush2.xpose.msra.mxu0 0.0
    %716 = vmatprep.subr.mxu0 0.0
    %717 = vmatpush2.xpose.msra.mxu0 0.0
    %718 = vmatprep.subr.mxu0 0.0
    %719 = vmatpush2.xpose.msra.mxu0 0.0
    %720 = vmatprep.subr.mxu0 0.0
    %721 = vmatpush2.xpose.msra.mxu0 0.0
    %722 = vmatprep.subr.mxu0 0.0
    %723 = vmatpush2.xpose.msra.mxu0 0.0
    %724 = vmatprep.mubr.f32.mxu0 0.0
    %v725 = vand.u32 %v504, 4294901760
    %v726 = vsub.f32 %v504, %v725
    %727 = vmatmul.mubr.f32.gmra.mxu0 %v726
    %v728 = vpop.f32.mrf.mxu0
    %v729 = vadd.f32 %v655, %v728
    %v730 = vpop.f32.mrf.mxu0
    %731 = vdwg.mxu0
    %732 = vmatprep.subr.mxu0 0.0
    %733 = vmatpush1.xpose.msra.mxu0 0.0
    %734 = vmatprep.subr.mxu0 0.0
    %735 = vmatpush1.xpose.msra.mxu0 0.0
    %736 = vmatprep.subr.mxu0 0.0
    %737 = vmatpush1.xpose.msra.mxu0 0.0
    %738 = vmatprep.subr.mxu0 0.0
    %739 = vmatpush1.xpose.msra.mxu0 0.0
    %740 = vmatprep.subr.mxu0 0.0
    %741 = vmatpush1.xpose.msra.mxu0 0.0
    %742 = vmatprep.subr.mxu0 0.0
    %743 = vmatpush1.xpose.msra.mxu0 0.0
    %744 = vmatprep.subr.mxu0 0.0
    %745 = vmatpush1.xpose.msra.mxu0 0.0
    %746 = vmatprep.subr.mxu0 0.0
    %747 = vmatpush1.xpose.msra.mxu0 0.0
    %748 = vmatprep.subr.mxu0 0.0
    %749 = vmatpush1.xpose.msra.mxu0 0.0
    %750 = vmatprep.subr.mxu0 0.0
    %751 = vmatpush1.xpose.msra.mxu0 0.0
    %752 = vmatprep.subr.mxu0 0.0
    %753 = vmatpush1.xpose.msra.mxu0 0.0
    %754 = vmatprep.subr.mxu0 0.0
    %755 = vmatpush1.xpose.msra.mxu0 0.0
    %756 = vmatprep.subr.mxu0 0.0
    %757 = vmatpush1.xpose.msra.mxu0 0.0
    %758 = vmatprep.subr.mxu0 0.0
    %759 = vmatpush1.xpose.msra.mxu0 0.0
    %760 = vmatprep.subr.mxu0 0.0
    %761 = vmatpush1.xpose.msra.mxu0 0.0
    %762 = vmatprep.subr.mxu0 0.0
    %v763 = vand.u32 %v504, 4294901760
    %764 = vmatpush1.xpose.msra.mxu0 %v763
    %765 = vmatprep.subr.mxu0 0.0
    %766 = vmatpush2.xpose.msra.mxu0 0.0
    %767 = vmatprep.subr.mxu0 0.0
    %768 = vmatpush2.xpose.msra.mxu0 0.0
    %769 = vmatprep.subr.mxu0 0.0
    %770 = vmatpush2.xpose.msra.mxu0 0.0
    %771 = vmatprep.subr.mxu0 0.0
    %772 = vmatpush2.xpose.msra.mxu0 0.0
    %773 = vmatprep.subr.mxu0 0.0
    %774 = vmatpush2.xpose.msra.mxu0 0.0
    %775 = vmatprep.subr.mxu0 0.0
    %776 = vmatpush2.xpose.msra.mxu0 0.0
    %777 = vmatprep.subr.mxu0 0.0
    %778 = vmatpush2.xpose.msra.mxu0 0.0
    %779 = vmatprep.subr.mxu0 0.0
    %780 = vmatpush2.xpose.msra.mxu0 0.0
    %781 = vmatprep.subr.mxu0 0.0
    %782 = vmatpush2.xpose.msra.mxu0 0.0
    %783 = vmatprep.subr.mxu0 0.0
    %784 = vmatpush2.xpose.msra.mxu0 0.0
    %785 = vmatprep.subr.mxu0 0.0
    %786 = vmatpush2.xpose.msra.mxu0 0.0
    %787 = vmatprep.subr.mxu0 0.0
    %788 = vmatpush2.xpose.msra.mxu0 0.0
    %789 = vmatprep.subr.mxu0 0.0
    %790 = vmatpush2.xpose.msra.mxu0 0.0
    %791 = vmatprep.subr.mxu0 0.0
    %792 = vmatpush2.xpose.msra.mxu0 0.0
    %793 = vmatprep.subr.mxu0 0.0
    %794 = vmatpush2.xpose.msra.mxu0 0.0
    %795 = vmatprep.subr.mxu0 0.0
    %796 = vmatpush2.xpose.msra.mxu0 0.0
    %797 = vmatprep.mubr.f32.mxu0 0.0
    %v798 = vand.u32 %v504, 4294901760
    %v799 = vsub.f32 %v504, %v798
    %v800 = vand.u32 %v799, 4294901760
    %801 = vmatmul.mubr.f32.gmra.mxu0 %v800
    %v802 = vpop.f32.mrf.mxu0
    %v803 = vadd.f32 %v729, %v802
    %v804 = vpop.f32.mrf.mxu0
    %805 = vdwg.mxu0
    %806 = vmatprep.subr.mxu0 0.0
    %807 = vmatpush1.xpose.msra.mxu0 0.0
    %808 = vmatprep.subr.mxu0 0.0
    %809 = vmatpush1.xpose.msra.mxu0 0.0
    %810 = vmatprep.subr.mxu0 0.0
    %811 = vmatpush1.xpose.msra.mxu0 0.0
    %812 = vmatprep.subr.mxu0 0.0
    %813 = vmatpush1.xpose.msra.mxu0 0.0
    %814 = vmatprep.subr.mxu0 0.0
    %815 = vmatpush1.xpose.msra.mxu0 0.0
    %816 = vmatprep.subr.mxu0 0.0
    %817 = vmatpush1.xpose.msra.mxu0 0.0
    %818 = vmatprep.subr.mxu0 0.0
    %819 = vmatpush1.xpose.msra.mxu0 0.0
    %820 = vmatprep.subr.mxu0 0.0
    %821 = vmatpush1.xpose.msra.mxu0 0.0
    %822 = vmatprep.subr.mxu0 0.0
    %823 = vmatpush1.xpose.msra.mxu0 0.0
    %824 = vmatprep.subr.mxu0 0.0
    %825 = vmatpush1.xpose.msra.mxu0 0.0
    %826 = vmatprep.subr.mxu0 0.0
    %827 = vmatpush1.xpose.msra.mxu0 0.0
    %828 = vmatprep.subr.mxu0 0.0
    %829 = vmatpush1.xpose.msra.mxu0 0.0
    %830 = vmatprep.subr.mxu0 0.0
    %831 = vmatpush1.xpose.msra.mxu0 0.0
    %832 = vmatprep.subr.mxu0 0.0
    %833 = vmatpush1.xpose.msra.mxu0 0.0
    %834 = vmatprep.subr.mxu0 0.0
    %835 = vmatpush1.xpose.msra.mxu0 0.0
    %836 = vmatprep.subr.mxu0 0.0
    %v837 = vand.u32 %v504, 4294901760
    %v838 = vsub.f32 %v504, %v837
    %v839 = vand.u32 %v838, 4294901760
    %840 = vmatpush1.xpose.msra.mxu0 %v839
    %841 = vmatprep.subr.mxu0 0.0
    %842 = vmatpush2.xpose.msra.mxu0 0.0
    %843 = vmatprep.subr.mxu0 0.0
    %844 = vmatpush2.xpose.msra.mxu0 0.0
    %845 = vmatprep.subr.mxu0 0.0
    %846 = vmatpush2.xpose.msra.mxu0 0.0
    %847 = vmatprep.subr.mxu0 0.0
    %848 = vmatpush2.xpose.msra.mxu0 0.0
    %849 = vmatprep.subr.mxu0 0.0
    %850 = vmatpush2.xpose.msra.mxu0 0.0
    %851 = vmatprep.subr.mxu0 0.0
    %852 = vmatpush2.xpose.msra.mxu0 0.0
    %853 = vmatprep.subr.mxu0 0.0
    %854 = vmatpush2.xpose.msra.mxu0 0.0
    %855 = vmatprep.subr.mxu0 0.0
    %856 = vmatpush2.xpose.msra.mxu0 0.0
    %857 = vmatprep.subr.mxu0 0.0
    %858 = vmatpush2.xpose.msra.mxu0 0.0
    %859 = vmatprep.subr.mxu0 0.0
    %860 = vmatpush2.xpose.msra.mxu0 0.0
    %861 = vmatprep.subr.mxu0 0.0
    %862 = vmatpush2.xpose.msra.mxu0 0.0
    %863 = vmatprep.subr.mxu0 0.0
    %864 = vmatpush2.xpose.msra.mxu0 0.0
    %865 = vmatprep.subr.mxu0 0.0
    %866 = vmatpush2.xpose.msra.mxu0 0.0
    %867 = vmatprep.subr.mxu0 0.0
    %868 = vmatpush2.xpose.msra.mxu0 0.0
    %869 = vmatprep.subr.mxu0 0.0
    %870 = vmatpush2.xpose.msra.mxu0 0.0
    %871 = vmatprep.subr.mxu0 0.0
    %872 = vmatpush2.xpose.msra.mxu0 0.0
    %873 = vmatprep.mubr.f32.mxu0 0.0
    %v874 = vand.u32 %v504, 4294901760
    %875 = vmatmul.mubr.f32.gmra.mxu0 %v874
    %v876 = vpop.f32.mrf.mxu0
    %v877 = vadd.f32 %v803, %v876
    %v878 = vpop.f32.mrf.mxu0
    %879 = vdwg.mxu0
    %880 = vmatprep.subr.mxu0 0.0
    %881 = vmatpush1.xpose.msra.mxu0 0.0
    %882 = vmatprep.subr.mxu0 0.0
    %883 = vmatpush1.xpose.msra.mxu0 0.0
    %884 = vmatprep.subr.mxu0 0.0
    %885 = vmatpush1.xpose.msra.mxu0 0.0
    %886 = vmatprep.subr.mxu0 0.0
    %887 = vmatpush1.xpose.msra.mxu0 0.0
    %888 = vmatprep.subr.mxu0 0.0
    %889 = vmatpush1.xpose.msra.mxu0 0.0
    %890 = vmatprep.subr.mxu0 0.0
    %891 = vmatpush1.xpose.msra.mxu0 0.0
    %892 = vmatprep.subr.mxu0 0.0
    %893 = vmatpush1.xpose.msra.mxu0 0.0
    %894 = vmatprep.subr.mxu0 0.0
    %895 = vmatpush1.xpose.msra.mxu0 0.0
    %896 = vmatprep.subr.mxu0 0.0
    %897 = vmatpush1.xpose.msra.mxu0 0.0
    %898 = vmatprep.subr.mxu0 0.0
    %899 = vmatpush1.xpose.msra.mxu0 0.0
    %900 = vmatprep.subr.mxu0 0.0
    %901 = vmatpush1.xpose.msra.mxu0 0.0
    %902 = vmatprep.subr.mxu0 0.0
    %903 = vmatpush1.xpose.msra.mxu0 0.0
    %904 = vmatprep.subr.mxu0 0.0
    %905 = vmatpush1.xpose.msra.mxu0 0.0
    %906 = vmatprep.subr.mxu0 0.0
    %907 = vmatpush1.xpose.msra.mxu0 0.0
    %908 = vmatprep.subr.mxu0 0.0
    %909 = vmatpush1.xpose.msra.mxu0 0.0
    %910 = vmatprep.subr.mxu0 0.0
    %v911 = vand.u32 %v504, 4294901760
    %912 = vmatpush1.xpose.msra.mxu0 %v911
    %913 = vmatprep.subr.mxu0 0.0
    %914 = vmatpush2.xpose.msra.mxu0 0.0
    %915 = vmatprep.subr.mxu0 0.0
    %916 = vmatpush2.xpose.msra.mxu0 0.0
    %917 = vmatprep.subr.mxu0 0.0
    %918 = vmatpush2.xpose.msra.mxu0 0.0
    %919 = vmatprep.subr.mxu0 0.0
    %920 = vmatpush2.xpose.msra.mxu0 0.0
    %921 = vmatprep.subr.mxu0 0.0
    %922 = vmatpush2.xpose.msra.mxu0 0.0
    %923 = vmatprep.subr.mxu0 0.0
    %924 = vmatpush2.xpose.msra.mxu0 0.0
    %925 = vmatprep.subr.mxu0 0.0
    %926 = vmatpush2.xpose.msra.mxu0 0.0
    %927 = vmatprep.subr.mxu0 0.0
    %928 = vmatpush2.xpose.msra.mxu0 0.0
    %929 = vmatprep.subr.mxu0 0.0
    %930 = vmatpush2.xpose.msra.mxu0 0.0
    %931 = vmatprep.subr.mxu0 0.0
    %932 = vmatpush2.xpose.msra.mxu0 0.0
    %933 = vmatprep.subr.mxu0 0.0
    %934 = vmatpush2.xpose.msra.mxu0 0.0
    %935 = vmatprep.subr.mxu0 0.0
    %936 = vmatpush2.xpose.msra.mxu0 0.0
    %937 = vmatprep.subr.mxu0 0.0
    %938 = vmatpush2.xpose.msra.mxu0 0.0
    %939 = vmatprep.subr.mxu0 0.0
    %940 = vmatpush2.xpose.msra.mxu0 0.0
    %941 = vmatprep.subr.mxu0 0.0
    %942 = vmatpush2.xpose.msra.mxu0 0.0
    %943 = vmatprep.subr.mxu0 0.0
    %944 = vmatpush2.xpose.msra.mxu0 0.0
    %945 = vmatprep.mubr.f32.mxu0 0.0
    %v946 = vand.u32 %v504, 4294901760
    %947 = vmatmul.mubr.f32.gmra.mxu0 %v946
    %v948 = vpop.f32.mrf.mxu0
    %v949 = vadd.f32 %v877, %v948
    %v950 = vpop.f32.mrf.mxu0
    %951 = vdwg.mxu0
    %v952 = vsub.f32 %v500, %v949
    %v953 = vand.u32 2147483647, %v952
    %vm954 = vcmask 64512
    %v955 = vsel %vm954, %v953, 0.0
    %956 = vadd.xlane.f32.xlu0 %v955
    %v957 = vpop.xlane.xlu0 %956
    %v958 = vrot.slane %v957, 4
    %v959 = vadd.f32 %v957, %v958
    %v960 = vrot.slane %v959, 2
    %v961 = vadd.f32 %v959, %v960
    %v962 = vrot.slane %v961, 1
    %v963 = vadd.f32 %v961, %v962
    %s964 = vtos %v963
    %s965 = smul.f32 %s964, 0.015625
    %s966 = scalar_lea.smem [#allocation7], 0
    %967 = sst [smem:[%s966]] %s965
    // Predicated region
    $region18: #{tpu_custom_call.1} parent=1 // pred_check
      _
    $region19: #{tpu_custom_call.1} parent=1 // pred_check_branch
      %969 = sbr.rel (0) target = $region21
    $region20: #{tpu_custom_call.1} parent=1 // pred_region
      %s971 = ssub.s32 16, 16
      %972 = vsyncadd [#allocation4], %s971
      %975 = dma.smem_to_hbm [#allocation7], 16, %s2, [#allocation4]
    $region21: #{tpu_custom_call.1} parent=1 // pred_fallthru
      _
    // Predicated region
    $region22: #{tpu_custom_call.1} parent=1 // pred_check
      _
    $region23: #{tpu_custom_call.1} parent=1 // pred_check_branch
      %977 = sbr.rel (0) target = $region25
    $region24: #{tpu_custom_call.1} parent=1 // pred_region
      %978 = dma.done [#allocation4], 16
    $region25: #{tpu_custom_call.1} parent=1 // pred_fallthru
      _
    %979 = sfence
    %980 = vsyncpa [#allocation3], 1
    %981 = vsyncpa [#allocation6], 1
    %982 = vsyncpa [#allocation4], 1

</llo_original>
